<compile_context>
chip_gen: v7x
topology: tpu7x:2x2x1
jax: 0.10.0
libtpu: 0.0.40
codegen_flags: <defaults>
</compile_context>

<pallas_src>
import functools
import math

import jax
import jax.numpy as jnp
from jax.experimental import pallas as pl
from jax.experimental.pallas import tpu as pltpu


def _round_up(x, m):
    return ((x + m - 1) // m) * m


def _pick_tm(M):
    """Row tile.  M<=256: one full-dim block (no overhang, no waste).
    M>256: >=2 blocks (keeps both v7x TensorCores busy), multiple of 8,
    capped at 512."""
    if M <= 256:
        return max(1, M)
    if M <= 1024:
        return _round_up((M + 1) // 2, 8)
    return 512


def _pick_tk(k_pad, cap=512):
    """Largest multiple-of-128 tile <= cap dividing k_pad (k_pad % 128 == 0)."""
    for t in (512, 384, 256, 128):
        if t <= cap and k_pad % t == 0:
            return t
    return 128


def _pick_tn(n_pad, odim, cap=512):
    """Like _pick_tk but also <= odim (so output blocks never exceed the
    unpadded output width) whenever odim >= 128."""
    eff_cap = min(cap, odim) if odim >= 128 else cap
    for t in (512, 384, 256, 128):
        if t <= eff_cap and n_pad % t == 0:
            return t
    return 128


# ----------------------------------------------------------------------------
# Path 1 kernels: weight fully VMEM-resident, single grid axis over rows.
# ----------------------------------------------------------------------------
def _fused_kernel_bias(x_ref, w_ref, b_ref, o_ref):
    # x: (tm, K)  w: (K, N) resident  b: (1, N)  o: (tm, N)
    acc = jnp.dot(x_ref[...], w_ref[...], preferred_element_type=jnp.float32)
    o_ref[...] = (acc + b_ref[...].astype(jnp.float32)).astype(o_ref.dtype)


def _fused_kernel_nobias(x_ref, w_ref, o_ref):
    o_ref[...] = jnp.dot(
        x_ref[...], w_ref[...], preferred_element_type=jnp.float32
    ).astype(o_ref.dtype)


# ----------------------------------------------------------------------------
# Path 2 kernels: tiled matmul, f32 accumulator initialized with the bias.
# ----------------------------------------------------------------------------
def _tiled_kernel_bias(x_ref, w_ref, b_ref, o_ref, acc_ref):
    k = pl.program_id(2)

    @pl.when(k == 0)
    def _():
        # Bias-initialized accumulator: removes the epilogue add.
        acc_ref[...] = jnp.broadcast_to(
            b_ref[...].astype(jnp.float32), acc_ref.shape)

    acc_ref[...] += jnp.dot(
        x_ref[...], w_ref[...], preferred_element_type=jnp.float32)

    @pl.when(k == pl.num_programs(2) - 1)
    def _():
        o_ref[...] = acc_ref[...].astype(o_ref.dtype)


def _tiled_kernel_nobias(x_ref, w_ref, o_ref, acc_ref):
    k = pl.program_id(2)

    @pl.when(k == 0)
    def _():
        acc_ref[...] = jnp.zeros_like(acc_ref)

    acc_ref[...] += jnp.dot(
        x_ref[...], w_ref[...], preferred_element_type=jnp.float32)

    @pl.when(k == pl.num_programs(2) - 1)
    def _():
        o_ref[...] = acc_ref[...].astype(o_ref.dtype)


# ----------------------------------------------------------------------------
# Pallas wrappers
# ----------------------------------------------------------------------------
@functools.partial(jax.jit, static_argnames=("tm",))
def _linear_small(x2d, w_t, b2d, *, tm):
    """Small weight: (K, N) stays resident in VMEM (constant block index ->
    one DMA); rows stream through in tm-sized blocks. No padding anywhere."""
    M, K = x2d.shape
    _, N = w_t.shape

    grid = (pl.cdiv(M, tm),)
    x_spec = pl.BlockSpec((tm, K), lambda i: (i, 0))
    w_spec = pl.BlockSpec((K, N), lambda i: (0, 0))   # constant -> single DMA
    o_spec = pl.BlockSpec((tm, N), lambda i: (i, 0))

    itemsize = jnp.dtype(x2d.dtype).itemsize
    cost = pl.CostEstimate(
        flops=2 * M * K * N,
        transcendentals=0,
        bytes_accessed=itemsize * (M * K + M * N)
        + jnp.dtype(w_t.dtype).itemsize * K * N,
    )
    cparams = pltpu.CompilerParams(dimension_semantics=("parallel",))

    if b2d is not None:
        b_spec = pl.BlockSpec((1, N), lambda i: (0, 0))
        return pl.pallas_call(
            _fused_kernel_bias,
            out_shape=jax.ShapeDtypeStruct((M, N), x2d.dtype),
            grid_spec=pltpu.PrefetchScalarGridSpec(
                num_scalar_prefetch=0, grid=grid,
                in_specs=[x_spec, w_spec, b_spec], out_specs=o_spec),
            compiler_params=cparams, cost_estimate=cost,
        )(x2d, w_t, b2d)
    return pl.pallas_call(
        _fused_kernel_nobias,
        out_shape=jax.ShapeDtypeStruct((M, N), x2d.dtype),
        grid_spec=pltpu.PrefetchScalarGridSpec(
            num_scalar_prefetch=0, grid=grid,
            in_specs=[x_spec, w_spec], out_specs=o_spec),
        compiler_params=cparams, cost_estimate=cost,
    )(x2d, w_t)


@functools.partial(jax.jit, static_argnames=("tm", "tn", "tk", "odim"))
def _linear_tiled(x2d, w_t, b2d, *, tm, tn, tk, odim):
    """General tiled matmul.  w_t is (K_pad, N_pad), zero-padded at module
    construction.  Only the K axis of x is zero-padded (correctness); the M
    and N block overhangs never reach HBM."""
    M, K = x2d.shape
    K_pad, N_pad = w_t.shape

    if K_pad != K:
        # Contraction axis must be zero-padded; M/N need no padding.
        x2d = jnp.pad(x2d, ((0, 0), (0, K_pad - K)))

    # Lane-dense output: keep odim columns directly when odim >= 128 (the
    # last N block is simply partial); only pad+slice for tiny odim.
    out_n = odim if odim >= 128 else N_pad

    grid = (pl.cdiv(M, tm), N_pad // tn, K_pad // tk)

    x_spec = pl.BlockSpec((tm, tk), lambda i, j, k: (i, k))
    w_spec = pl.BlockSpec((tk, tn), lambda i, j, k: (k, j))
    o_spec = pl.BlockSpec((tm, tn), lambda i, j, k: (i, j))

    itemsize = jnp.dtype(x2d.dtype).itemsize
    cost = pl.CostEstimate(
        flops=2 * M * K_pad * N_pad,
        transcendentals=0,
        bytes_accessed=itemsize * (M * K_pad + M * out_n)
        + jnp.dtype(w_t.dtype).itemsize * K_pad * N_pad,
    )
    cparams = pltpu.CompilerParams(
        dimension_semantics=("parallel", "parallel", "arbitrary"),
        vmem_limit_bytes=32 * 1024 * 1024,
    )

    if b2d is not None:
        b_spec = pl.BlockSpec((1, tn), lambda i, j, k: (0, j))
        y = pl.pallas_call(
            _tiled_kernel_bias,
            out_shape=jax.ShapeDtypeStruct((M, out_n), x2d.dtype),
            grid_spec=pltpu.PrefetchScalarGridSpec(
                num_scalar_prefetch=0, grid=grid,
                in_specs=[x_spec, w_spec, b_spec], out_specs=o_spec,
                scratch_shapes=[pltpu.VMEM((tm, tn), jnp.float32)]),
            compiler_params=cparams, cost_estimate=cost,
        )(x2d, w_t, b2d)
    else:
        y = pl.pallas_call(
            _tiled_kernel_nobias,
            out_shape=jax.ShapeDtypeStruct((M, out_n), x2d.dtype),
            grid_spec=pltpu.PrefetchScalarGridSpec(
                num_scalar_prefetch=0, grid=grid,
                in_specs=[x_spec, w_spec], out_specs=o_spec,
                scratch_shapes=[pltpu.VMEM((tm, tn), jnp.float32)]),
            compiler_params=cparams, cost_estimate=cost,
        )(x2d, w_t)

    return y if out_n == odim else y[:, :odim]


# ----------------------------------------------------------------------------
# Module wrapper (mirrors tssep.train.net.Linear.forward)
# ----------------------------------------------------------------------------
class LinearPallas:
    """JAX/Pallas port of tssep.train.net.Linear."""

    def __init__(self, idim, odim, bias=True, *, key=None, dtype=jnp.float32):
        self.idim = idim
        self.odim = odim
        self.bias = bias
        if key is None:
            key = jax.random.PRNGKey(0)
        kw, kb = jax.random.split(key)
        # Deterministic init mirroring torch.nn.Linear's U(-1/sqrt(idim), ...).
        bound = 1.0 / (idim ** 0.5)
        self.weight = jax.random.uniform(
            kw, (odim, idim), dtype=dtype, minval=-bound, maxval=bound)
        self.b = (jax.random.uniform(
            kb, (odim,), dtype=dtype, minval=-bound, maxval=bound)
            if bias else None)

        # One-time weight transpose (idim, odim); kernel never transposes.
        w_t = jnp.transpose(self.weight)

        # Small weights (the tssep config): keep the weight unpadded and
        # VMEM-resident, no K grid axis, no padding at all.
        self._small = (idim <= 512) and (odim <= 1024)
        if self._small:
            self._w_t = w_t
            self._b2d = self.b.reshape(1, odim) if bias else None
            self._tk = None
            self._tn = None
        else:
            # Pad K/N to multiples of 128 (not of tk/tn), then pick tiles
            # that divide the padded dims.
            k_pad = _round_up(idim, 128)
            n_pad = _round_up(odim, 128)
            self._w_t = jnp.pad(w_t, ((0, k_pad - idim), (0, n_pad - odim)))
            self._b2d = (jnp.pad(self.b, (0, n_pad - odim)).reshape(1, n_pad)
                         if bias else None)
            self._tk = _pick_tk(k_pad)
            self._tn = _pick_tn(n_pad, odim)

    def __call__(self, AuxInput, Input=None, batched=False):
        # `Input` is ignored, matching the PyTorch module.
        if isinstance(AuxInput, (tuple, list)):
            if isinstance(AuxInput[0], (tuple, list)):
                AuxInput = jnp.stack([jnp.stack(list(i)) for i in AuxInput])
            else:
                AuxInput = jnp.stack(list(AuxInput))

        x = jnp.asarray(AuxInput)
        assert x.shape[-1] == self.idim, (x.shape, self.idim)

        lead = x.shape[:-1]
        M = int(math.prod(lead)) if lead else 1
        x2d = x.reshape(M, self.idim)
        tm = _pick_tm(M)

        if self._small:
            y2d = _linear_small(x2d, self._w_t, self._b2d, tm=tm)
        else:
            y2d = _linear_tiled(x2d, self._w_t, self._b2d,
                                tm=tm, tn=self._tn, tk=self._tk,
                                odim=self.odim)
        return y2d.reshape(*lead, self.odim)


# ----------------------------------------------------------------------------
# Self-test
# ----------------------------------------------------------------------------
if __name__ == "__main__":
    key = jax.random.PRNGKey(0)
    k_mod, k_x, k_in, k_big, k_mod2, k_x2 = jax.random.split(key, 6)

    idim, odim = 32, 64
    batch, seq = 2, 8

    mod = LinearPallas(idim, odim, bias=True, key=k_mod)

    aux = jax.random.normal(k_x, (batch, seq, idim), dtype=jnp.float32)
    ignored_input = jax.random.normal(k_in, (batch, seq, idim), dtype=jnp.float32)

    out = mod(aux, ignored_input)
    out = jax.block_until_ready(out)
    assert out.shape == (batch, seq, odim), out.shape

    # Reference (same math as torch.nn.Linear).
    ref = aux @ mod.weight.T + mod.b
    assert jnp.allclose(out, ref, atol=1e-5, rtol=1e-5), float(
        jnp.max(jnp.abs(out - ref)))

    # Exercise the list-stacking path of forward().
    aux_list = [aux[0], aux[1]]
    out2 = jax.block_until_ready(mod(aux_list, None))
    assert jnp.allclose(out2, ref, atol=1e-5, rtol=1e-5)

    # A shape with M not a multiple of the row tile (M=300 -> 2 row blocks,
    # the second one overhangs the array).
    aux_big = jax.random.normal(k_big, (3, 100, idim), dtype=jnp.float32)
    out3 = jax.block_until_ready(mod(aux_big, None))
    ref3 = aux_big @ mod.weight.T + mod.b
    assert jnp.allclose(out3, ref3, atol=1e-5, rtol=1e-5), float(
        jnp.max(jnp.abs(out3 - ref3)))

    # No-bias variant.
    mod_nb = LinearPallas(idim, odim, bias=False, key=k_mod)
    out4 = jax.block_until_ready(mod_nb(aux, None))
    ref4 = aux @ mod_nb.weight.T
    assert jnp.allclose(out4, ref4, atol=1e-5, rtol=1e-5)

    # Tiled path (idim > 512): exercises K zero-padding (600 -> 640),
    # the K grid axis and the bias-initialized accumulator.
    idim2, odim2 = 600, 256
    mod5 = LinearPallas(idim2, odim2, bias=True, key=k_mod2)
    aux5 = jax.random.normal(k_x2, (batch, seq, idim2), dtype=jnp.float32)
    out5 = jax.block_until_ready(mod5(aux5, None))
    ref5 = jnp.matmul(aux5, mod5.weight.T,
                      precision=jax.lax.Precision.HIGHEST) + mod5.b
    assert out5.shape == (batch, seq, odim2), out5.shape
    assert jnp.allclose(out5, ref5, atol=2e-3, rtol=2e-3), float(
        jnp.max(jnp.abs(out5 - ref5)))

    print("KERNEL_OK")
</pallas_src>

<mosaic_0001>
module attributes {stable_mosaic.version = 11 : i64} {
  func.func @_fused_kernel_bias(%arg0: i32, %arg1: memref<16x32xf32, #tpu.memory_space<vmem>>, %arg2: memref<32x64xf32, #tpu.memory_space<vmem>>, %arg3: memref<1x64xf32, #tpu.memory_space<vmem>>, %arg4: memref<16x64xf32, #tpu.memory_space<vmem>>) attributes {dimension_semantics = [#tpu.dimension_semantics<parallel>], iteration_bounds = array<i64: 1>, scalar_prefetch = 0 : i64, scratch_operands = 0 : i64, tpu.core_type = #tpu.core_type<tc>, window_params = [{transform_indices = @transform_0, window_bounds = array<i64: 16, 32>}, {pipeline_mode = #tpu.pipeline_mode<synchronous>, transform_indices = @transform_1, window_bounds = array<i64: 32, 64>}, {pipeline_mode = #tpu.pipeline_mode<synchronous>, transform_indices = @transform_2, window_bounds = array<i64: 1, 64>}, {transform_indices = @transform_3, window_bounds = array<i64: 16, 64>}]} {
    %c0 = arith.constant 0 : index
    %c0_0 = arith.constant 0 : index
    %0 = vector.load %arg1[%c0, %c0_0] : memref<16x32xf32, #tpu.memory_space<vmem>>, vector<16x32xf32>
    %c0_1 = arith.constant 0 : index
    %c0_2 = arith.constant 0 : index
    %1 = vector.load %arg2[%c0_1, %c0_2] : memref<32x64xf32, #tpu.memory_space<vmem>>, vector<32x64xf32>
    %cst = arith.constant dense<0.000000e+00> : vector<16x64xf32>
    %2 = tpu.matmul %0, %1, %cst {dimension_numbers = #tpu.dot_dimension_numbers<[1], [0], [0], [1], [0, 0, 1, 1], [], []>} : vector<16x32xf32>, vector<32x64xf32>, vector<16x64xf32> -> vector<16x64xf32>
    %c0_3 = arith.constant 0 : index
    %c0_4 = arith.constant 0 : index
    %3 = vector.load %arg3[%c0_3, %c0_4] : memref<1x64xf32, #tpu.memory_space<vmem>>, vector<1x64xf32>
    %4 = vector.broadcast %3 : vector<1x64xf32> to vector<16x64xf32>
    %5 = arith.addf %2, %4 : vector<16x64xf32>
    %c0_5 = arith.constant 0 : index
    %c0_6 = arith.constant 0 : index
    %6 = vector.load %arg4[%c0_5, %c0_6] : memref<16x64xf32, #tpu.memory_space<vmem>>, vector<16x64xf32>
    tpu.vector_store %arg4[%c0_5, %c0_6], %5 {strides = array<i32>} : memref<16x64xf32, #tpu.memory_space<vmem>>, vector<16x64xf32>,
    return
  }
  func.func @transform_0(%arg0: i32) -> (i32, i32) {
    %c0_i32 = arith.constant 0 : i32
    %c0_i32_0 = arith.constant 0 : i32
    return %arg0, %c0_i32 : i32, i32
  }
  func.func @transform_1(%arg0: i32) -> (i32, i32) {
    %c0_i32 = arith.constant 0 : i32
    %c0_i32_0 = arith.constant 0 : i32
    %c0_i32_1 = arith.constant 0 : i32
    return %c0_i32, %c0_i32_0 : i32, i32
  }
  func.func @transform_2(%arg0: i32) -> (i32, i32) {
    %c0_i32 = arith.constant 0 : i32
    %c0_i32_0 = arith.constant 0 : i32
    %c0_i32_1 = arith.constant 0 : i32
    return %c0_i32, %c0_i32_0 : i32, i32
  }
  func.func @transform_3(%arg0: i32) -> (i32, i32) {
    %c0_i32 = arith.constant 0 : i32
    %c0_i32_0 = arith.constant 0 : i32
    return %arg0, %c0_i32 : i32, i32
  }
}

</mosaic_0001>

<llo_original>
// kernel: _linear_small.1
$region0: #{_linear_small.1}
  #allocation0 [shape = 'u32[]', space=smem, size = 0x4, offset = 0x4, fixed_abs, tag = 'smem constant byte address 0x4 - core index']
  #allocation1 [shape = 'u32[144,128]{1,0:T(1,128)}', space=vmem, size = 0x12000, scoped, tag = 'internal scratch']
  %s0 = inlined_call_operand.hbm [shape: f32[16,32], index: 0, kind: input, shape index: {}]
  %s1 = inlined_call_operand.hbm [shape: f32[32,64], index: 1, kind: input, shape index: {}]
  %s2 = inlined_call_operand.vmem [shape: f32[1,64], index: 2, kind: input, shape index: {}]
  %s3 = inlined_call_operand.hbm [shape: f32[16,64], index: 3, kind: output, shape index: {}]
  %s4 = sld [smem:[#allocation0]]
  $region30: #{_linear_small.1} parent=0
    _
  %s6 = ssub.s32 1, %s4
  %s7 = scalar_select 0, %s6, %s4
  $region1: #{_linear_small.1} parent=0
    #allocation2 [shape = 'u8[8192]{0}', space=vmem, size = 0x2000, scoped, tag = 'input window, operand 0, single buffered']
    #allocation3 [shape = 's32[1]{0}', space=sflag, size = 0x4, scoped, tag = 'scoped memory for _linear_small.1']
    #allocation4 [shape = 's32[1]{0}', space=sflag, size = 0x4, scoped, tag = 'scoped memory for _linear_small.1']
    #allocation5 [shape = 'u8[16384]{0}', space=vmem, size = 0x4000, scoped, tag = 'input window, operand 1, single buffered']
    #allocation6 [shape = 's32[1]{0}', space=sflag, size = 0x4, scoped, tag = 'scoped memory for _linear_small.1']
    #allocation7 [shape = 'u8[8192]{0}', space=vmem, size = 0x2000, scoped, tag = 'output window, operand 0, single buffered']
    %8 = vsyncpa [#allocation3], 0
    %9 = vsyncpa [#allocation6], 0
    %10 = vsyncpa [#allocation4], 0
    // Predicated region
    $region2: #{_linear_small.1} parent=1 // pred_check
      _
    $region3: #{_linear_small.1} parent=1 // pred_check_branch
      %12 = sbr.rel (0) target = $region5
    $region4: #{_linear_small.1} parent=1 // pred_region
      %s14 = ssub.s32 256, 256
      %15 = vsyncadd [#allocation3], %s14
      %s16 = sshll.u32 [#allocation2], 4
      %s17 = int_to_ptr.vmem [resolvable:$true] %s16
      %22 = dma.hbm_to_vmem [thread:$0]  %s0, 256, %s17, [#allocation3], 128, 128, 8
    $region5: #{_linear_small.1} parent=1 // pred_fallthru
      _
    // Predicated region
    $region6: #{_linear_small.1} parent=1 // pred_check
      _
    $region7: #{_linear_small.1} parent=1 // pred_check_branch
      %24 = sbr.rel (0) target = $region9
    $region8: #{_linear_small.1} parent=1 // pred_region
      %s26 = ssub.s32 512, 512
      %27 = vsyncadd [#allocation6], %s26
      %s28 = sshll.u32 [#allocation5], 4
      %s29 = int_to_ptr.vmem [resolvable:$true] %s28
      %34 = dma.hbm_to_vmem [thread:$0]  %s1, 512, %s29, [#allocation6], 128, 128, 8
    $region9: #{_linear_small.1} parent=1 // pred_fallthru
      _
    // Predicated region
    $region10: #{_linear_small.1} parent=1 // pred_check
      _
    $region11: #{_linear_small.1} parent=1 // pred_check_branch
      %36 = sbr.rel (0) target = $region13
    $region12: #{_linear_small.1} parent=1 // pred_region
      _
    $region13: #{_linear_small.1} parent=1 // pred_fallthru
      _
    // Predicated region
    $region14: #{_linear_small.1} parent=1 // pred_check
      _
    $region15: #{_linear_small.1} parent=1 // pred_check_branch
      %38 = sbr.rel (0) target = $region17
    $region16: #{_linear_small.1} parent=1 // pred_region
      %39 = dma.done [#allocation3], 256
    $region17: #{_linear_small.1} parent=1 // pred_fallthru
      _
    // Predicated region
    $region18: #{_linear_small.1} parent=1 // pred_check
      _
    $region19: #{_linear_small.1} parent=1 // pred_check_branch
      %41 = sbr.rel (0) target = $region21
    $region20: #{_linear_small.1} parent=1 // pred_region
      %42 = dma.done [#allocation6], 512
    $region21: #{_linear_small.1} parent=1 // pred_fallthru
      _
    %v43 = vld [vmem:[#allocation2] sm:$0xff]
    %v44 = vld [vmem:[#allocation2 + $0x8] sm:$0xff]
    %v45 = vld [vmem:[#allocation5] sm:$0xff]
    %v46 = vld [vmem:[#allocation5 + $0x8] sm:$0xff]
    %v47 = vld [vmem:[#allocation5 + $0x10] sm:$0xff]
    %v48 = vld [vmem:[#allocation5 + $0x18] sm:$0xff]
    %v49 = vld [vmem:[%s2] sm:$0x1]
    %v51 = vlaneseq
    %v52 = vshrl.u32 %v51, 7
    %v53 = vsub.s32 0, %v52
    %v54 = vrot.slane %v49, %v53
    %vm56 = vcmask 261120
    %v58 = vsel %vm56, %v43, 0
    %v61 = vsel %vm56, %v44, 0
    %63 = vmatprep.subr.mxu0 0.0
    %64 = vmatpush1.msra.mxu0 %v45
    %65 = vmatprep.subr.mxu0 0.0
    %66 = vmatpush1.msra.mxu0 %v46
    %67 = vmatprep.subr.mxu0 0.0
    %68 = vmatpush1.msra.mxu0 %v47
    %69 = vmatprep.subr.mxu0 0.0
    %70 = vmatpush1.msra.mxu0 %v48
    %71 = vmatprep.subr.mxu0 0.0
    %72 = vmatpush1.msra.mxu0 0.0
    %73 = vmatprep.subr.mxu0 0.0
    %74 = vmatpush1.msra.mxu0 0.0
    %75 = vmatprep.subr.mxu0 0.0
    %76 = vmatpush1.msra.mxu0 0.0
    %77 = vmatprep.subr.mxu0 0.0
    %78 = vmatpush1.msra.mxu0 0.0
    %79 = vmatprep.subr.mxu0 0.0
    %80 = vmatpush1.msra.mxu0 0.0
    %81 = vmatprep.subr.mxu0 0.0
    %82 = vmatpush1.msra.mxu0 0.0
    %83 = vmatprep.subr.mxu0 0.0
    %84 = vmatpush1.msra.mxu0 0.0
    %85 = vmatprep.subr.mxu0 0.0
    %86 = vmatpush1.msra.mxu0 0.0
    %87 = vmatprep.subr.mxu0 0.0
    %88 = vmatpush1.msra.mxu0 0.0
    %89 = vmatprep.subr.mxu0 0.0
    %90 = vmatpush1.msra.mxu0 0.0
    %91 = vmatprep.subr.mxu0 0.0
    %92 = vmatpush1.msra.mxu0 0.0
    %93 = vmatprep.subr.mxu0 0.0
    %94 = vmatpush1.msra.mxu0 0.0
    %95 = vmatprep.subr.mxu0 0.0
    %96 = vmatpush1.msra.mxu0 0.0
    %97 = vmatprep.subr.mxu0 0.0
    %98 = vmatpush1.msra.mxu0 0.0
    %99 = vmatprep.subr.mxu0 0.0
    %100 = vmatpush1.msra.mxu0 0.0
    %101 = vmatprep.subr.mxu0 0.0
    %102 = vmatpush1.msra.mxu0 0.0
    %103 = vmatprep.subr.mxu0 0.0
    %104 = vmatpush1.msra.mxu0 0.0
    %105 = vmatprep.subr.mxu0 0.0
    %106 = vmatpush1.msra.mxu0 0.0
    %107 = vmatprep.subr.mxu0 0.0
    %108 = vmatpush1.msra.mxu0 0.0
    %109 = vmatprep.subr.mxu0 0.0
    %110 = vmatpush1.msra.mxu0 0.0
    %111 = vmatprep.subr.mxu0 0.0
    %112 = vmatpush1.msra.mxu0 0.0
    %113 = vmatprep.subr.mxu0 0.0
    %114 = vmatpush1.msra.mxu0 0.0
    %115 = vmatprep.subr.mxu0 0.0
    %116 = vmatpush1.msra.mxu0 0.0
    %117 = vmatprep.subr.mxu0 0.0
    %118 = vmatpush1.msra.mxu0 0.0
    %119 = vmatprep.subr.mxu0 0.0
    %120 = vmatpush1.msra.mxu0 0.0
    %121 = vmatprep.subr.mxu0 0.0
    %122 = vmatpush1.msra.mxu0 0.0
    %123 = vmatprep.subr.mxu0 0.0
    %124 = vmatpush1.msra.mxu0 0.0
    %125 = vmatprep.subr.mxu0 0.0
    %126 = vmatpush1.msra.mxu0 0.0
    %127 = vmatprep.mubr.f32.mxu0 0.0
    %128 = vmatmul.mubr.f32.gmra.mrb[0].mxu0 %v58
    %v129 = vpop.f32.mrb[0].mxu0
    %v130 = vadd.f32 %v54, %v129
    %v131 = vpop.f32.mrb[0].mxu0
    %132 = vmatprep.mubr.f32.mxu0 0.0
    %133 = vmatmul.mubr.f32.gmra.mrb[0].mxu0 %v61
    %v134 = vpop.f32.mrb[0].mxu0
    %v135 = vadd.f32 %v54, %v134
    %v136 = vpop.f32.mrb[0].mxu0
    %137 = vdwg.mxu0
    %vm138 = vcmask 523264
    %139 = vst.msk [vmem:[#allocation7] sm:$0xff] %vm138, %v130
    %140 = vst.msk [vmem:[#allocation7 + $0x8] sm:$0xff] %vm138, %v135
    // Predicated region
    $region22: #{_linear_small.1} parent=1 // pred_check
      _
    $region23: #{_linear_small.1} parent=1 // pred_check_branch
      %142 = sbr.rel (0) target = $region25
    $region24: #{_linear_small.1} parent=1 // pred_region
      %s144 = ssub.s32 256, 256
      %145 = vsyncadd [#allocation4], %s144
      %s146 = sshll.u32 [#allocation7], 4
      %s147 = int_to_ptr.vmem [resolvable:$true] %s146
      %152 = dma.vmem_to_hbm [thread:$0]  %s147, 256, %s3, [#allocation4], 128, 128, 8
    $region25: #{_linear_small.1} parent=1 // pred_fallthru
      _
    // Predicated region
    $region26: #{_linear_small.1} parent=1 // pred_check
      _
    $region27: #{_linear_small.1} parent=1 // pred_check_branch
      %154 = sbr.rel (0) target = $region29
    $region28: #{_linear_small.1} parent=1 // pred_region
      %155 = dma.done [#allocation4], 256
    $region29: #{_linear_small.1} parent=1 // pred_fallthru
      _
    %156 = vsyncpa [#allocation3], 1
    %157 = vsyncpa [#allocation6], 1
    %158 = vsyncpa [#allocation4], 1

</llo_original>
